<compile_context>
chip_gen: v5e
topology: v5e:2x2
jax: 0.10.0
libtpu: 0.0.40
codegen_flags: <defaults>
</compile_context>

<pallas_src>
import functools
import math

import jax
import jax.numpy as jnp
from jax.experimental import pallas as pl
from jax.experimental.pallas import tpu as pltpu


def _new_gelu(x):
    # NewGELUActivation (tanh approximation), computed in f32.
    c = math.sqrt(2.0 / math.pi)
    return 0.5 * x * (1.0 + jnp.tanh(c * (x + 0.044715 * (x * x * x))))


def _ffn_kernel(x_ref, w1_ref, b1_ref, w2_ref, b2_ref, o_ref, acc_ref):
    # x_ref  : (tm, Dp)   tile of token rows
    # w1_ref : (Dp, th)   up-projection weight block (streamed over H)
    # b1_ref : (1, th)    up-projection bias block
    # w2_ref : (th, Dp)   down-projection weight block (streamed over H)
    # b2_ref : (1, Dp)    down-projection bias
    # o_ref  : (tm, Dp)   output tile (resident across the H axis)
    # acc_ref: (tm, Dp)   f32 accumulator scratch
    h_idx = pl.program_id(1)

    @pl.when(h_idx == 0)
    def _init():
        acc_ref[...] = jnp.zeros_like(acc_ref)

    # Up-projection for this hidden block: native-dtype MXU, f32 accumulate.
    h = jnp.dot(x_ref[...], w1_ref[...], preferred_element_type=jnp.float32)
    h = h + b1_ref[...].astype(jnp.float32)

    # NewGELU in f32 (tanh -> EUP).
    h = _new_gelu(h)

    # Down-projection contribution of this hidden block, accumulated in f32.
    acc_ref[...] += jnp.dot(h.astype(w2_ref.dtype), w2_ref[...],
                            preferred_element_type=jnp.float32)

    @pl.when(h_idx == pl.num_programs(1) - 1)
    def _finalize():
        y = acc_ref[...] + b2_ref[...].astype(jnp.float32)
        o_ref[...] = y.astype(o_ref.dtype)


def _round_up(x, m):
    return ((x + m - 1) // m) * m


@functools.partial(jax.jit, static_argnames=("block_rows", "block_hidden"))
def feedforward(e, w1, b1, w2, b2, *, block_rows=256, block_hidden=512):
    """e: (B, S, D); w1: (D, H); b1: (1, H); w2: (H, D); b2: (1, D)."""
    B, S, D = e.shape
    H = w1.shape[1]
    rows = B * S

    # Normalize tile sizes to hardware-friendly multiples.
    block_rows = max(8, (block_rows // 8) * 8)
    block_hidden = max(128, (block_hidden // 128) * 128)

    # Row tiling.
    tm = min(block_rows, rows)
    rows_p = _round_up(rows, tm)

    # Hidden (reduction) tiling.
    if H <= block_hidden:
        th, Hp = H, H
    else:
        th = block_hidden
        Hp = _round_up(H, th)

    # Lane-dense model dim (pad to 128 once; zero pads are inert).
    Dp = D if D % 128 == 0 else _round_up(D, 128)

    x = e.reshape(rows, D)
    if rows_p != rows or Dp != D:
        x = jnp.pad(x, ((0, rows_p - rows), (0, Dp - D)))
    if Dp != D or Hp != H:
        w1 = jnp.pad(w1, ((0, Dp - D), (0, Hp - H)))
        b1 = jnp.pad(b1, ((0, 0), (0, Hp - H)))
        w2 = jnp.pad(w2, ((0, Hp - H), (0, Dp - D)))
        b2 = jnp.pad(b2, ((0, 0), (0, Dp - D)))

    grid = (rows_p // tm, Hp // th)

    # Explicit VMEM budget: double-buffered tiles + f32 accumulator + h block.
    isx = jnp.dtype(e.dtype).itemsize
    isw = jnp.dtype(w1.dtype).itemsize
    vmem_bytes = (
        2 * tm * Dp * isx          # x tile
        + 2 * Dp * th * isw        # w1 block
        + 2 * th * isw             # b1 block
        + 2 * th * Dp * isw        # w2 block
        + 2 * Dp * isw             # b2
        + 2 * tm * Dp * isx        # out tile
        + tm * Dp * 4              # f32 accumulator scratch
        + 2 * tm * th * 4          # f32 activation working set
    )
    vmem_limit = int(min(max(2 * vmem_bytes, 16 * 1024 * 1024),
                         64 * 1024 * 1024))

    out = pl.pallas_call(
        _ffn_kernel,
        out_shape=jax.ShapeDtypeStruct((rows_p, Dp), e.dtype),
        grid_spec=pltpu.PrefetchScalarGridSpec(
            num_scalar_prefetch=0,
            grid=grid,
            in_specs=[
                pl.BlockSpec((tm, Dp), lambda i, h: (i, 0)),   # x rows
                pl.BlockSpec((Dp, th), lambda i, h: (0, h)),   # w1 H-block
                pl.BlockSpec((1, th), lambda i, h: (0, h)),    # b1 H-block
                pl.BlockSpec((th, Dp), lambda i, h: (h, 0)),   # w2 H-block
                pl.BlockSpec((1, Dp), lambda i, h: (0, 0)),    # b2
            ],
            out_specs=pl.BlockSpec((tm, Dp), lambda i, h: (i, 0)),
            scratch_shapes=[pltpu.VMEM((tm, Dp), jnp.float32)],
        ),
        compiler_params=pltpu.CompilerParams(
            dimension_semantics=("parallel", "arbitrary"),
            vmem_limit_bytes=vmem_limit,
        ),
    )(x, w1, b1, w2, b2)

    return out[:rows, :D].reshape(B, S, D)


def _reference(e, w1, b1, w2, b2):
    h = jnp.einsum("bsd,dh->bsh", e.astype(jnp.float32),
                   w1.astype(jnp.float32)) + b1
    h = _new_gelu(h)
    y = jnp.einsum("bsh,hd->bsd", h, w2.astype(jnp.float32)) + b2
    return y.astype(e.dtype)


if __name__ == "__main__":
    # Small config consistent with the module: batch=2, seq=8, d_model=64 -> hidden=256.
    B, S, D = 2, 8, 64
    H = 4 * D

    key = jax.random.PRNGKey(0)
    k_e, k_w1, k_b1, k_w2, k_b2 = jax.random.split(key, 5)

    e = jax.random.normal(k_e, (B, S, D), dtype=jnp.float32)

    # "Linear" params stored as (in, out) for the kernel (PyTorch nn.Linear
    # keeps (out, in); equivalent up to a transpose done once at setup).
    w1 = jax.random.normal(k_w1, (D, H), dtype=jnp.float32) * (1.0 / math.sqrt(D))
    b1 = jax.random.normal(k_b1, (1, H), dtype=jnp.float32) * 0.01
    w2 = jax.random.normal(k_w2, (H, D), dtype=jnp.float32) * (1.0 / math.sqrt(H))
    b2 = jax.random.normal(k_b2, (1, D), dtype=jnp.float32) * 0.01

    ref = _reference(e, w1, b1, w2, b2)

    # Default tiles (single H block at this small size).
    out = jax.block_until_ready(feedforward(e, w1, b1, w2, b2))
    assert out.shape == (B, S, D), out.shape
    assert jnp.allclose(out, ref, atol=1e-4, rtol=1e-4), \
        float(jnp.max(jnp.abs(out - ref)))

    # Small tiles to exercise the multi-block row axis and the H-reduction
    # accumulator path (grid = (2, 2)).
    out2 = jax.block_until_ready(
        feedforward(e, w1, b1, w2, b2, block_rows=8, block_hidden=128))
    assert jnp.allclose(out2, ref, atol=1e-4, rtol=1e-4), \
        float(jnp.max(jnp.abs(out2 - ref)))

    print("KERNEL_OK")
</pallas_src>

<mosaic_0001>
module attributes {stable_mosaic.version = 11 : i64} {
  func.func @_ffn_kernel(%arg0: i32, %arg1: i32, %arg2: memref<16x128xf32, #tpu.memory_space<vmem>>, %arg3: memref<128x256xf32, #tpu.memory_space<vmem>>, %arg4: memref<1x256xf32, #tpu.memory_space<vmem>>, %arg5: memref<256x128xf32, #tpu.memory_space<vmem>>, %arg6: memref<1x128xf32, #tpu.memory_space<vmem>>, %arg7: memref<16x128xf32, #tpu.memory_space<vmem>>, %arg8: memref<16x128xf32, #tpu.memory_space<vmem>>) attributes {dimension_semantics = [#tpu.dimension_semantics<parallel>, #tpu.dimension_semantics<arbitrary>], iteration_bounds = array<i64: 1, 1>, scalar_prefetch = 0 : i64, scratch_operands = 1 : i64, tpu.core_type = #tpu.core_type<tc>, window_params = [{transform_indices = @transform_0, window_bounds = array<i64: 16, 128>}, {transform_indices = @transform_1, window_bounds = array<i64: 128, 256>}, {transform_indices = @transform_2, window_bounds = array<i64: 1, 256>}, {transform_indices = @transform_3, window_bounds = array<i64: 256, 128>}, {pipeline_mode = #tpu.pipeline_mode<synchronous>, transform_indices = @transform_4, window_bounds = array<i64: 1, 128>}, {transform_indices = @transform_5, window_bounds = array<i64: 16, 128>}]} {
    %c0_i32 = arith.constant 0 : i32
    %0 = arith.cmpi eq, %arg1, %c0_i32 : i32
    %1 = arith.extui %0 : i1 to i32
    %c0_i32_0 = arith.constant 0 : i32
    %2 = arith.cmpi ne, %1, %c0_i32_0 : i32
    scf.if %2 {
      %cst_19 = arith.constant 0.000000e+00 : f32
      %30 = vector.broadcast %cst_19 : f32 to vector<16x128xf32>
      %c0_20 = arith.constant 0 : index
      %c0_21 = arith.constant 0 : index
      %31 = vector.load %arg8[%c0_20, %c0_21] : memref<16x128xf32, #tpu.memory_space<vmem>>, vector<16x128xf32>
      tpu.vector_store %arg8[%c0_20, %c0_21], %30 {strides = array<i32>} : memref<16x128xf32, #tpu.memory_space<vmem>>, vector<16x128xf32>,
    } else {
    }
    %c0 = arith.constant 0 : index
    %c0_1 = arith.constant 0 : index
    %3 = vector.load %arg2[%c0, %c0_1] : memref<16x128xf32, #tpu.memory_space<vmem>>, vector<16x128xf32>
    %c0_2 = arith.constant 0 : index
    %c0_3 = arith.constant 0 : index
    %4 = vector.load %arg3[%c0_2, %c0_3] : memref<128x256xf32, #tpu.memory_space<vmem>>, vector<128x256xf32>
    %cst = arith.constant dense<0.000000e+00> : vector<16x256xf32>
    %5 = tpu.matmul %3, %4, %cst {dimension_numbers = #tpu.dot_dimension_numbers<[1], [0], [0], [1], [0, 0, 1, 1], [], []>} : vector<16x128xf32>, vector<128x256xf32>, vector<16x256xf32> -> vector<16x256xf32>
    %c0_4 = arith.constant 0 : index
    %c0_5 = arith.constant 0 : index
    %6 = vector.load %arg4[%c0_4, %c0_5] : memref<1x256xf32, #tpu.memory_space<vmem>>, vector<1x256xf32>
    %7 = vector.broadcast %6 : vector<1x256xf32> to vector<16x256xf32>
    %8 = arith.addf %5, %7 : vector<16x256xf32>
    %cst_6 = arith.constant 5.000000e-01 : f32
    %9 = vector.broadcast %cst_6 : f32 to vector<16x256xf32>
    %10 = arith.mulf %9, %8 : vector<16x256xf32>
    %11 = arith.mulf %8, %8 : vector<16x256xf32>
    %12 = arith.mulf %11, %8 : vector<16x256xf32>
    %cst_7 = arith.constant 4.471500e-02 : f32
    %13 = vector.broadcast %cst_7 : f32 to vector<16x256xf32>
    %14 = arith.mulf %13, %12 : vector<16x256xf32>
    %15 = arith.addf %8, %14 : vector<16x256xf32>
    %cst_8 = arith.constant 0.797884583 : f32
    %16 = vector.broadcast %cst_8 : f32 to vector<16x256xf32>
    %17 = arith.mulf %16, %15 : vector<16x256xf32>
    %18 = math.tanh %17 : vector<16x256xf32>
    %cst_9 = arith.constant 1.000000e+00 : f32
    %19 = vector.broadcast %cst_9 : f32 to vector<16x256xf32>
    %20 = arith.addf %19, %18 : vector<16x256xf32>
    %21 = arith.mulf %10, %20 : vector<16x256xf32>
    %c0_10 = arith.constant 0 : index
    %c0_11 = arith.constant 0 : index
    %22 = vector.load %arg8[%c0_10, %c0_11] : memref<16x128xf32, #tpu.memory_space<vmem>>, vector<16x128xf32>
    %c0_12 = arith.constant 0 : index
    %c0_13 = arith.constant 0 : index
    %23 = vector.load %arg5[%c0_12, %c0_13] : memref<256x128xf32, #tpu.memory_space<vmem>>, vector<256x128xf32>
    %cst_14 = arith.constant dense<0.000000e+00> : vector<16x128xf32>
    %24 = tpu.matmul %21, %23, %cst_14 {dimension_numbers = #tpu.dot_dimension_numbers<[1], [0], [0], [1], [0, 0, 1, 1], [], []>} : vector<16x256xf32>, vector<256x128xf32>, vector<16x128xf32> -> vector<16x128xf32>
    %25 = arith.addf %22, %24 : vector<16x128xf32>
    %c0_15 = arith.constant 0 : index
    %c0_16 = arith.constant 0 : index
    %26 = vector.load %arg8[%c0_15, %c0_16] : memref<16x128xf32, #tpu.memory_space<vmem>>, vector<16x128xf32>
    tpu.vector_store %arg8[%c0_15, %c0_16], %25 {strides = array<i32>} : memref<16x128xf32, #tpu.memory_space<vmem>>, vector<16x128xf32>,
    %c0_i32_17 = arith.constant 0 : i32
    %27 = arith.cmpi eq, %arg1, %c0_i32_17 : i32
    %28 = arith.extui %27 : i1 to i32
    %c0_i32_18 = arith.constant 0 : i32
    %29 = arith.cmpi ne, %28, %c0_i32_18 : i32
    scf.if %29 {
      %c0_19 = arith.constant 0 : index
      %c0_20 = arith.constant 0 : index
      %30 = vector.load %arg8[%c0_19, %c0_20] : memref<16x128xf32, #tpu.memory_space<vmem>>, vector<16x128xf32>
      %c0_21 = arith.constant 0 : index
      %c0_22 = arith.constant 0 : index
      %31 = vector.load %arg6[%c0_21, %c0_22] : memref<1x128xf32, #tpu.memory_space<vmem>>, vector<1x128xf32>
      %32 = vector.broadcast %31 : vector<1x128xf32> to vector<16x128xf32>
      %33 = arith.addf %30, %32 : vector<16x128xf32>
      %c0_23 = arith.constant 0 : index
      %c0_24 = arith.constant 0 : index
      %34 = vector.load %arg7[%c0_23, %c0_24] : memref<16x128xf32, #tpu.memory_space<vmem>>, vector<16x128xf32>
      tpu.vector_store %arg7[%c0_23, %c0_24], %33 {strides = array<i32>} : memref<16x128xf32, #tpu.memory_space<vmem>>, vector<16x128xf32>,
    } else {
    }
    return
  }
  func.func @transform_0(%arg0: i32, %arg1: i32) -> (i32, i32) {
    %c0_i32 = arith.constant 0 : i32
    %c0_i32_0 = arith.constant 0 : i32
    return %arg0, %c0_i32 : i32, i32
  }
  func.func @transform_1(%arg0: i32, %arg1: i32) -> (i32, i32) {
    %c0_i32 = arith.constant 0 : i32
    %c0_i32_0 = arith.constant 0 : i32
    return %c0_i32, %arg1 : i32, i32
  }
  func.func @transform_2(%arg0: i32, %arg1: i32) -> (i32, i32) {
    %c0_i32 = arith.constant 0 : i32
    %c0_i32_0 = arith.constant 0 : i32
    return %c0_i32, %arg1 : i32, i32
  }
  func.func @transform_3(%arg0: i32, %arg1: i32) -> (i32, i32) {
    %c0_i32 = arith.constant 0 : i32
    %c0_i32_0 = arith.constant 0 : i32
    return %arg1, %c0_i32 : i32, i32
  }
  func.func @transform_4(%arg0: i32, %arg1: i32) -> (i32, i32) {
    %c0_i32 = arith.constant 0 : i32
    %c0_i32_0 = arith.constant 0 : i32
    %c0_i32_1 = arith.constant 0 : i32
    return %c0_i32, %c0_i32_0 : i32, i32
  }
  func.func @transform_5(%arg0: i32, %arg1: i32) -> (i32, i32) {
    %c0_i32 = arith.constant 0 : i32
    %c0_i32_0 = arith.constant 0 : i32
    return %arg0, %c0_i32 : i32, i32
  }
}

</mosaic_0001>

<llo_original>
// kernel: feedforward.1
$region0: #{feedforward.1}
  #allocation0 [shape = 'u32[]', space=smem, size = 0x4, offset = 0x4, fixed_abs, tag = 'smem constant byte address 0x4 - core index']
  #allocation1 [shape = 'u32[72,128]{1,0:T(1,128)}', space=vmem, size = 0x9000, scoped, tag = 'internal scratch']
  #allocation2 [shape = 'f32[16,128]{1,0:T(8,128)}', space=vmem, size = 0x2000, scoped, tag = 'scratch operand']
  %s0 = inlined_call_operand.vmem [shape: f32[16,128], index: 0, kind: input, shape index: {}]
  %s1 = inlined_call_operand.vmem [shape: f32[128,256], index: 1, kind: input, shape index: {}]
  %s2 = inlined_call_operand.vmem [shape: f32[1,256], index: 2, kind: input, shape index: {}]
  %s3 = inlined_call_operand.vmem [shape: f32[256,128], index: 3, kind: input, shape index: {}]
  %s4 = inlined_call_operand.vmem [shape: f32[1,128], index: 4, kind: input, shape index: {}]
  %s5 = inlined_call_operand.vmem [shape: f32[16,128], index: 5, kind: output, shape index: {}]
  %s6 = sld [smem:[#allocation0]]
  $region38: #{feedforward.1} parent=0
    _
  %s8 = ssub.s32 1, %s6
  %s9 = scalar_select 0, %s8, %s6
  // Predicated region
  $region2: #{feedforward.1} parent=0 // pred_check
    _
  $region3: #{feedforward.1} parent=0 // pred_check_branch
    %11 = sbr.rel (0) target = $region5
  $region4: #{feedforward.1} parent=0 // pred_region
    _
  $region5: #{feedforward.1} parent=0 // pred_fallthru
    _
  // Predicated region
  $region6: #{feedforward.1} parent=0 // pred_check
    _
  $region7: #{feedforward.1} parent=0 // pred_check_branch
    %13 = sbr.rel (0) target = $region9
  $region8: #{feedforward.1} parent=0 // pred_region
    _
  $region9: #{feedforward.1} parent=0 // pred_fallthru
    _
  // Predicated region
  $region10: #{feedforward.1} parent=0 // pred_check
    _
  $region11: #{feedforward.1} parent=0 // pred_check_branch
    %15 = sbr.rel (0) target = $region13
  $region12: #{feedforward.1} parent=0 // pred_region
    _
  $region13: #{feedforward.1} parent=0 // pred_fallthru
    _
  // Predicated region
  $region14: #{feedforward.1} parent=0 // pred_check
    _
  $region15: #{feedforward.1} parent=0 // pred_check_branch
    %17 = sbr.rel (0) target = $region17
  $region16: #{feedforward.1} parent=0 // pred_region
    _
  $region17: #{feedforward.1} parent=0 // pred_fallthru
    _
  // Predicated region
  $region18: #{feedforward.1} parent=0 // pred_check
    _
  $region19: #{feedforward.1} parent=0 // pred_check_branch
    %19 = sbr.rel (0) target = $region21
  $region20: #{feedforward.1} parent=0 // pred_region
    _
  $region21: #{feedforward.1} parent=0 // pred_fallthru
    _
  %p20 = scmp.eq.s32.totalorder 0, 0
  // Predicated region
  $region22: #{feedforward.1} parent=0 // pred_check
    %p21 = pneg %p20
  $region23: #{feedforward.1} parent=0 // pred_check_branch
    %23 = sbr.rel (%p21) target = $region25
  $region24: #{feedforward.1} parent=0 // pred_region
    %24 = vst [vmem:[#allocation2] sm:$0xff] 0.0
    %25 = vst [vmem:[#allocation2 + $0x8] sm:$0xff] 0.0
  $region25: #{feedforward.1} parent=0 // pred_fallthru
    _
  %v26 = vld [vmem:[%s0] sm:$0xff]
  %v27 = vld [vmem:[%s0 + $0x8] sm:$0xff]
  %v28 = vld [vmem:[%s1] sm:$0xff]
  %v29 = vld [vmem:[%s1 + $0x8] sm:$0xff]
  %v30 = vld [vmem:[%s1 + $0x10] sm:$0xff]
  %v31 = vld [vmem:[%s1 + $0x18] sm:$0xff]
  %v32 = vld [vmem:[%s1 + $0x20] sm:$0xff]
  %v33 = vld [vmem:[%s1 + $0x28] sm:$0xff]
  %v34 = vld [vmem:[%s1 + $0x30] sm:$0xff]
  %v35 = vld [vmem:[%s1 + $0x38] sm:$0xff]
  %v36 = vld [vmem:[%s1 + $0x40] sm:$0xff]
  %v37 = vld [vmem:[%s1 + $0x48] sm:$0xff]
  %v38 = vld [vmem:[%s1 + $0x50] sm:$0xff]
  %v39 = vld [vmem:[%s1 + $0x58] sm:$0xff]
  %v40 = vld [vmem:[%s1 + $0x60] sm:$0xff]
  %v41 = vld [vmem:[%s1 + $0x68] sm:$0xff]
  %v42 = vld [vmem:[%s1 + $0x70] sm:$0xff]
  %v43 = vld [vmem:[%s1 + $0x78] sm:$0xff]
  %v44 = vld [vmem:[%s1 + $0x80] sm:$0xff]
  %v45 = vld [vmem:[%s1 + $0x88] sm:$0xff]
  %v46 = vld [vmem:[%s1 + $0x90] sm:$0xff]
  %v47 = vld [vmem:[%s1 + $0x98] sm:$0xff]
  %v48 = vld [vmem:[%s1 + $0xa0] sm:$0xff]
  %v49 = vld [vmem:[%s1 + $0xa8] sm:$0xff]
  %v50 = vld [vmem:[%s1 + $0xb0] sm:$0xff]
  %v51 = vld [vmem:[%s1 + $0xb8] sm:$0xff]
  %v52 = vld [vmem:[%s1 + $0xc0] sm:$0xff]
  %v53 = vld [vmem:[%s1 + $0xc8] sm:$0xff]
  %v54 = vld [vmem:[%s1 + $0xd0] sm:$0xff]
  %v55 = vld [vmem:[%s1 + $0xd8] sm:$0xff]
  %v56 = vld [vmem:[%s1 + $0xe0] sm:$0xff]
  %v57 = vld [vmem:[%s1 + $0xe8] sm:$0xff]
  %v58 = vld [vmem:[%s1 + $0xf0] sm:$0xff]
  %v59 = vld [vmem:[%s1 + $0xf8] sm:$0xff]
  %v60 = vld [vmem:[%s2] sm:$0x3]
  %v62 = vperm.slane %v60, 0
  %v63 = vperm.slane %v60, 1
  %66 = vmatpush.msra.mxu0 %v58
  %67 = vmatpush.msra.mxu0 %v56
  %68 = vmatpush.msra.mxu0 %v54
  %69 = vmatpush.msra.mxu0 %v52
  %70 = vmatpush.msra.mxu0 %v50
  %71 = vmatpush.msra.mxu0 %v48
  %72 = vmatpush.msra.mxu0 %v46
  %73 = vmatpush.msra.mxu0 %v44
  %74 = vmatpush.msra.mxu0 %v42
  %75 = vmatpush.msra.mxu0 %v40
  %76 = vmatpush.msra.mxu0 %v38
  %77 = vmatpush.msra.mxu0 %v36
  %78 = vmatpush.msra.mxu0 %v34
  %79 = vmatpush.msra.mxu0 %v32
  %80 = vmatpush.msra.mxu0 %v30
  %81 = vmatpush.msra.mxu0 %v28
  %82 = vmatmul.f32.gmra.mxu0 %v26
  %v83 = vpop.f32.mrf.mxu0
  %v84 = vadd.f32 %v62, %v83
  %85 = vmatmul.f32.gmra.mxu0 %v27
  %v86 = vpop.f32.mrf.mxu0
  %v87 = vadd.f32 %v62, %v86
  %88 = vdwg.mxu0
  %89 = vmatpush.msra.mxu0 %v59
  %90 = vmatpush.msra.mxu0 %v57
  %91 = vmatpush.msra.mxu0 %v55
  %92 = vmatpush.msra.mxu0 %v53
  %93 = vmatpush.msra.mxu0 %v51
  %94 = vmatpush.msra.mxu0 %v49
  %95 = vmatpush.msra.mxu0 %v47
  %96 = vmatpush.msra.mxu0 %v45
  %97 = vmatpush.msra.mxu0 %v43
  %98 = vmatpush.msra.mxu0 %v41
  %99 = vmatpush.msra.mxu0 %v39
  %100 = vmatpush.msra.mxu0 %v37
  %101 = vmatpush.msra.mxu0 %v35
  %102 = vmatpush.msra.mxu0 %v33
  %103 = vmatpush.msra.mxu0 %v31
  %104 = vmatpush.msra.mxu0 %v29
  %105 = vmatmul.f32.gmra.mxu0 %v26
  %v106 = vpop.f32.mrf.mxu0
  %v107 = vadd.f32 %v63, %v106
  %108 = vmatmul.f32.gmra.mxu0 %v27
  %v109 = vpop.f32.mrf.mxu0
  %v110 = vadd.f32 %v63, %v109
  %111 = vdwg.mxu0
  %v112 = vmul.f32 %v84, 0.5
  %v113 = vmul.f32 %v107, 0.5
  %v114 = vmul.f32 %v87, 0.5
  %v115 = vmul.f32 %v110, 0.5
  %v116 = vmul.f32 %v84, %v84
  %v117 = vmul.f32 %v107, %v107
  %v118 = vmul.f32 %v87, %v87
  %v119 = vmul.f32 %v110, %v110
  %v120 = vmul.f32 %v116, %v84
  %v121 = vmul.f32 %v117, %v107
  %v122 = vmul.f32 %v118, %v87
  %v123 = vmul.f32 %v119, %v110
  %v124 = vmul.f32 %v120, 0.044715
  %v125 = vmul.f32 %v121, 0.044715
  %v126 = vmul.f32 %v122, 0.044715
  %v127 = vmul.f32 %v123, 0.044715
  %v128 = vadd.f32 %v84, %v124
  %v129 = vadd.f32 %v107, %v125
  %v130 = vadd.f32 %v87, %v126
  %v131 = vadd.f32 %v110, %v127
  %v132 = vmul.f32 %v128, 0.7978846
  %v133 = vmul.f32 %v129, 0.7978846
  %v134 = vmul.f32 %v130, 0.7978846
  %v135 = vmul.f32 %v131, 0.7978846
  %v136 = vtanh.pop %v132
  %v137 = vtanh.pop %v133
  %v138 = vtanh.pop %v134
  %v139 = vtanh.pop %v135
  %v140 = vadd.f32 %v136, 1.0
  %v141 = vadd.f32 %v137, 1.0
  %v142 = vadd.f32 %v138, 1.0
  %v143 = vadd.f32 %v139, 1.0
  %v144 = vmul.f32 %v112, %v140
  %v145 = vmul.f32 %v113, %v141
  %v146 = vmul.f32 %v114, %v142
  %v147 = vmul.f32 %v115, %v143
  %v148 = vld [vmem:[#allocation2] sm:$0xff]
  %v149 = vld [vmem:[#allocation2 + $0x8] sm:$0xff]
  %v150 = vld [vmem:[%s3] sm:$0xff]
  %v151 = vld [vmem:[%s3 + $0x8] sm:$0xff]
  %v152 = vld [vmem:[%s3 + $0x10] sm:$0xff]
  %v153 = vld [vmem:[%s3 + $0x18] sm:$0xff]
  %v154 = vld [vmem:[%s3 + $0x20] sm:$0xff]
  %v155 = vld [vmem:[%s3 + $0x28] sm:$0xff]
  %v156 = vld [vmem:[%s3 + $0x30] sm:$0xff]
  %v157 = vld [vmem:[%s3 + $0x38] sm:$0xff]
  %v158 = vld [vmem:[%s3 + $0x40] sm:$0xff]
  %v159 = vld [vmem:[%s3 + $0x48] sm:$0xff]
  %v160 = vld [vmem:[%s3 + $0x50] sm:$0xff]
  %v161 = vld [vmem:[%s3 + $0x58] sm:$0xff]
  %v162 = vld [vmem:[%s3 + $0x60] sm:$0xff]
  %v163 = vld [vmem:[%s3 + $0x68] sm:$0xff]
  %v164 = vld [vmem:[%s3 + $0x70] sm:$0xff]
  %v165 = vld [vmem:[%s3 + $0x78] sm:$0xff]
  %v166 = vld [vmem:[%s3 + $0x80] sm:$0xff]
  %v167 = vld [vmem:[%s3 + $0x88] sm:$0xff]
  %v168 = vld [vmem:[%s3 + $0x90] sm:$0xff]
  %v169 = vld [vmem:[%s3 + $0x98] sm:$0xff]
  %v170 = vld [vmem:[%s3 + $0xa0] sm:$0xff]
  %v171 = vld [vmem:[%s3 + $0xa8] sm:$0xff]
  %v172 = vld [vmem:[%s3 + $0xb0] sm:$0xff]
  %v173 = vld [vmem:[%s3 + $0xb8] sm:$0xff]
  %v174 = vld [vmem:[%s3 + $0xc0] sm:$0xff]
  %v175 = vld [vmem:[%s3 + $0xc8] sm:$0xff]
  %v176 = vld [vmem:[%s3 + $0xd0] sm:$0xff]
  %v177 = vld [vmem:[%s3 + $0xd8] sm:$0xff]
  %v178 = vld [vmem:[%s3 + $0xe0] sm:$0xff]
  %v179 = vld [vmem:[%s3 + $0xe8] sm:$0xff]
  %v180 = vld [vmem:[%s3 + $0xf0] sm:$0xff]
  %v181 = vld [vmem:[%s3 + $0xf8] sm:$0xff]
  %182 = vmatpush.msra.mxu0 %v165
  %183 = vmatpush.msra.mxu0 %v164
  %184 = vmatpush.msra.mxu0 %v163
  %185 = vmatpush.msra.mxu0 %v162
  %186 = vmatpush.msra.mxu0 %v161
  %187 = vmatpush.msra.mxu0 %v160
  %188 = vmatpush.msra.mxu0 %v159
  %189 = vmatpush.msra.mxu0 %v158
  %190 = vmatpush.msra.mxu0 %v157
  %191 = vmatpush.msra.mxu0 %v156
  %192 = vmatpush.msra.mxu0 %v155
  %193 = vmatpush.msra.mxu0 %v154
  %194 = vmatpush.msra.mxu0 %v153
  %195 = vmatpush.msra.mxu0 %v152
  %196 = vmatpush.msra.mxu0 %v151
  %197 = vmatpush.msra.mxu0 %v150
  %198 = vmatmul.f32.gmra.mxu0 %v144
  %v199 = vpop.f32.mrf.mxu0
  %v200 = vadd.f32 0.0, %v199
  %201 = vmatmul.f32.gmra.mxu0 %v146
  %v202 = vpop.f32.mrf.mxu0
  %v203 = vadd.f32 0.0, %v202
  %204 = vdwg.mxu0
  %205 = vmatpush.msra.mxu0 %v181
  %206 = vmatpush.msra.mxu0 %v180
  %207 = vmatpush.msra.mxu0 %v179
  %208 = vmatpush.msra.mxu0 %v178
  %209 = vmatpush.msra.mxu0 %v177
  %210 = vmatpush.msra.mxu0 %v176
  %211 = vmatpush.msra.mxu0 %v175
  %212 = vmatpush.msra.mxu0 %v174
  %213 = vmatpush.msra.mxu0 %v173
  %214 = vmatpush.msra.mxu0 %v172
  %215 = vmatpush.msra.mxu0 %v171
  %216 = vmatpush.msra.mxu0 %v170
  %217 = vmatpush.msra.mxu0 %v169
  %218 = vmatpush.msra.mxu0 %v168
  %219 = vmatpush.msra.mxu0 %v167
  %220 = vmatpush.msra.mxu0 %v166
  %221 = vmatmul.f32.gmra.mxu0 %v145
  %v222 = vpop.f32.mrf.mxu0
  %v223 = vadd.f32 %v200, %v222
  %224 = vmatmul.f32.gmra.mxu0 %v147
  %v225 = vpop.f32.mrf.mxu0
  %v226 = vadd.f32 %v203, %v225
  %227 = vdwg.mxu0
  %v228 = vadd.f32 %v148, %v223
  %v229 = vadd.f32 %v149, %v226
  %230 = vst [vmem:[#allocation2] sm:$0xff] %v228
  %231 = vst [vmem:[#allocation2 + $0x8] sm:$0xff] %v229
  // Predicated region
  $region26: #{feedforward.1} parent=0 // pred_check
    %p232 = pneg %p20
  $region27: #{feedforward.1} parent=0 // pred_check_branch
    %234 = sbr.rel (%p232) target = $region29
  $region28: #{feedforward.1} parent=0 // pred_region
    %v235 = vld [vmem:[#allocation2] sm:$0xff]
    %v236 = vld [vmem:[#allocation2 + $0x8] sm:$0xff]
    %v237 = vld [vmem:[%s4] sm:$0x1]
    %v239 = vperm.slane %v237, 0
    %v241 = vadd.f32 %v235, %v239
    %v242 = vadd.f32 %v236, %v239
    %243 = vst [vmem:[%s5] sm:$0xff] %v241
    %244 = vst [vmem:[%s5 + $0x8] sm:$0xff] %v242
  $region29: #{feedforward.1} parent=0 // pred_fallthru
    _
  // Predicated region
  $region30: #{feedforward.1} parent=0 // pred_check
    _
  $region31: #{feedforward.1} parent=0 // pred_check_branch
    %246 = sbr.rel (0) target = $region33
  $region32: #{feedforward.1} parent=0 // pred_region
    _
  $region33: #{feedforward.1} parent=0 // pred_fallthru
    _
  // Predicated region
  $region34: #{feedforward.1} parent=0 // pred_check
    _
  $region35: #{feedforward.1} parent=0 // pred_check_branch
    %248 = sbr.rel (0) target = $region37
  $region36: #{feedforward.1} parent=0 // pred_region
    _
  $region37: #{feedforward.1} parent=0 // pred_fallthru
    _

</llo_original>
